<compile_context>
chip_gen: v7x
topology: tpu7x:2x2x1
jax: 0.10.0
libtpu: 0.0.40
codegen_flags: <defaults>
</compile_context>

<pallas_src>
import functools

import jax
import jax.numpy as jnp
from jax.experimental import pallas as pl
from jax.experimental.pallas import tpu as pltpu


def _round_up(x: int, m: int) -> int:
    return ((x + m - 1) // m) * m


def _cvae_generator_kernel(x_ref, w1_ref, b1_ref, w2_ref, b2_ref, out_ref):
    # Layer 1: fused cat(input, latent) @ W1 + b1, then ReLU.
    # bf16 operands -> MXU, f32 accumulation, f32 epilogue (VPU).
    h = jnp.dot(x_ref[...], w1_ref[...], preferred_element_type=jnp.float32)
    h = jnp.maximum(h + b1_ref[...], 0.0)
    # Layer 2: h @ W2 + b2 (no activation).  Only the dot operand is cast to
    # bf16; bias add stays in f32.
    y = jnp.dot(h.astype(w2_ref.dtype), w2_ref[...],
                preferred_element_type=jnp.float32)
    out_ref[...] = y + b2_ref[...]


@functools.partial(jax.jit, static_argnames=("block_b",))
def cvae_generator_forward(inp, latent, params, *, block_b=512):
    """inp: [B, Din], latent: [B, Dlat] -> [B, T * Dout_per_step]."""
    B, din = inp.shape
    _, dlat = latent.shape
    k1 = din + dlat
    w1, b1, w2, b2 = params["w1"], params["b1"], params["w2"], params["b2"]
    hidden = w1.shape[1]
    dout = w2.shape[1]
    out_dtype = inp.dtype

    # ---- operand prep (wrapper side; cheap, fused by XLA) -------------------
    # Lane-dense padding targets.
    k1_pad = _round_up(max(k1, 128), 128)
    hid_pad = _round_up(max(hidden, 128), 128)
    dout_pad = _round_up(max(dout, 128), 128)

    # Single concatenated activation, zero-padded on the contraction axis.
    x = jnp.concatenate([inp, latent], axis=-1).astype(jnp.bfloat16)  # [B, k1]
    x = jnp.pad(x, ((0, 0), (0, k1_pad - k1)))

    w1_bf = jnp.pad(w1.astype(jnp.bfloat16),
                    ((0, k1_pad - k1), (0, hid_pad - hidden)))        # [k1p, Hp]
    b1_f32 = jnp.pad(b1.astype(jnp.float32),
                     (0, hid_pad - hidden)).reshape(1, hid_pad)
    w2_bf = jnp.pad(w2.astype(jnp.bfloat16),
                    ((0, hid_pad - hidden), (0, dout_pad - dout)))    # [Hp, Op]
    b2_f32 = jnp.pad(b2.astype(jnp.float32),
                     (0, dout_pad - dout)).reshape(1, dout_pad)

    # Batch tiling: tile is a multiple of 8 sublanes; pad B so it divides.
    tb = min(block_b, _round_up(B, 8))
    b_pad = _round_up(B, tb)
    if b_pad != B:
        x = jnp.pad(x, ((0, b_pad - B), (0, 0)))
    grid = (b_pad // tb,)

    cost = pl.CostEstimate(
        flops=2 * b_pad * k1_pad * hid_pad + 2 * b_pad * hid_pad * dout_pad,
        transcendentals=0,
        bytes_accessed=(x.size * 2 + w1_bf.size * 2 + b1_f32.size * 4
                        + w2_bf.size * 2 + b2_f32.size * 4
                        + b_pad * dout_pad * 4),
    )

    out = pl.pallas_call(
        _cvae_generator_kernel,
        out_shape=jax.ShapeDtypeStruct((b_pad, dout_pad), jnp.float32),
        grid=grid,
        in_specs=[
            pl.BlockSpec((tb, k1_pad), lambda i: (i, 0)),       # x tiles stream
            pl.BlockSpec((k1_pad, hid_pad), lambda i: (0, 0)),  # weights stay
            pl.BlockSpec((1, hid_pad), lambda i: (0, 0)),       #   VMEM-resident
            pl.BlockSpec((hid_pad, dout_pad), lambda i: (0, 0)),
            pl.BlockSpec((1, dout_pad), lambda i: (0, 0)),
        ],
        out_specs=pl.BlockSpec((tb, dout_pad), lambda i: (i, 0)),
        compiler_params=pltpu.CompilerParams(
            dimension_semantics=("parallel",)),
        cost_estimate=cost,
    )(x, w1_bf, b1_f32, w2_bf, b2_f32)

    # Strip batch padding and the lane padding on the output feature axis.
    return out[:B, :dout].astype(out_dtype)


def init_params(key, input_dims, latent_dims, hidden, out_dims,
                dtype=jnp.float32):
    """Deterministic synthetic parameters matching the module's MLP shapes."""
    k1, k2, k3, k4 = jax.random.split(key, 4)
    d_in = input_dims + latent_dims
    s1 = 1.0 / jnp.sqrt(jnp.asarray(d_in, dtype))
    s2 = 1.0 / jnp.sqrt(jnp.asarray(hidden, dtype))
    return {
        "w1": jax.random.normal(k1, (d_in, hidden), dtype) * s1,
        "b1": jax.random.normal(k2, (hidden,), dtype) * s1,
        "w2": jax.random.normal(k3, (hidden, out_dims), dtype) * s2,
        "b2": jax.random.normal(k4, (out_dims,), dtype) * s2,
    }


def _reference(inp, latent, params):
    # Full-f32 reference of the original module semantics.
    x = jnp.concatenate([inp, latent], axis=-1)
    h = jnp.maximum(x @ params["w1"] + params["b1"], 0.0)
    return h @ params["w2"] + params["b2"]


if __name__ == "__main__":
    # Small shapes consistent with the module's forward.
    batch = 8
    input_dims = 32
    latent_dims = 16
    hidden = 256                       # fixed by channel_list=[..., 256, ...]
    output_dims_per_time_step = 2
    num_predict_time_steps = 8
    out_dims = num_predict_time_steps * output_dims_per_time_step   # 16

    key = jax.random.PRNGKey(0)
    k_in, k_lat, k_par = jax.random.split(key, 3)
    inp = jax.random.normal(k_in, (batch, input_dims), jnp.float32)
    latent = jax.random.normal(k_lat, (batch, latent_dims), jnp.float32)
    params = init_params(k_par, input_dims, latent_dims, hidden, out_dims)

    out = cvae_generator_forward(inp, latent, params)
    out = jax.block_until_ready(out)

    ref = _reference(inp, latent, params)
    assert out.shape == (batch, out_dims)
    # bf16 matmul operands with f32 accumulation -> loose tolerance vs the
    # full-f32 reference.
    assert jnp.allclose(out, ref, atol=5e-2, rtol=5e-2), "mismatch vs reference"

    print("KERNEL_OK")
</pallas_src>

<mosaic_0001>
module attributes {stable_mosaic.version = 11 : i64} {
  func.func @_cvae_generator_kernel(%arg0: i32, %arg1: memref<8x128xbf16, #tpu.memory_space<vmem>>, %arg2: memref<128x256xbf16, #tpu.memory_space<vmem>>, %arg3: memref<1x256xf32, #tpu.memory_space<vmem>>, %arg4: memref<256x128xbf16, #tpu.memory_space<vmem>>, %arg5: memref<1x128xf32, #tpu.memory_space<vmem>>, %arg6: memref<8x128xf32, #tpu.memory_space<vmem>>) attributes {dimension_semantics = [#tpu.dimension_semantics<parallel>], iteration_bounds = array<i64: 1>, scalar_prefetch = 0 : i64, scratch_operands = 0 : i64, tpu.core_type = #tpu.core_type<tc>, window_params = [{transform_indices = @transform_0, window_bounds = array<i64: 8, 128>}, {pipeline_mode = #tpu.pipeline_mode<synchronous>, transform_indices = @transform_1, window_bounds = array<i64: 128, 256>}, {pipeline_mode = #tpu.pipeline_mode<synchronous>, transform_indices = @transform_2, window_bounds = array<i64: 1, 256>}, {pipeline_mode = #tpu.pipeline_mode<synchronous>, transform_indices = @transform_3, window_bounds = array<i64: 256, 128>}, {pipeline_mode = #tpu.pipeline_mode<synchronous>, transform_indices = @transform_4, window_bounds = array<i64: 1, 128>}, {transform_indices = @transform_5, window_bounds = array<i64: 8, 128>}]} {
    %c0 = arith.constant 0 : index
    %c0_0 = arith.constant 0 : index
    %0 = vector.load %arg1[%c0, %c0_0] : memref<8x128xbf16, #tpu.memory_space<vmem>>, vector<8x128xbf16>
    %c0_1 = arith.constant 0 : index
    %c0_2 = arith.constant 0 : index
    %1 = vector.load %arg2[%c0_1, %c0_2] : memref<128x256xbf16, #tpu.memory_space<vmem>>, vector<128x256xbf16>
    %cst = arith.constant dense<0.000000e+00> : vector<8x256xf32>
    %2 = tpu.matmul %0, %1, %cst {dimension_numbers = #tpu.dot_dimension_numbers<[1], [0], [0], [1], [0, 0, 1, 1], [], []>} : vector<8x128xbf16>, vector<128x256xbf16>, vector<8x256xf32> -> vector<8x256xf32>
    %c0_3 = arith.constant 0 : index
    %c0_4 = arith.constant 0 : index
    %3 = vector.load %arg3[%c0_3, %c0_4] : memref<1x256xf32, #tpu.memory_space<vmem>>, vector<1x256xf32>
    %4 = vector.broadcast %3 : vector<1x256xf32> to vector<8x256xf32>
    %5 = arith.addf %2, %4 : vector<8x256xf32>
    %cst_5 = arith.constant 0.000000e+00 : f32
    %6 = vector.broadcast %cst_5 : f32 to vector<8x256xf32>
    %7 = arith.maximumf %5, %6 : vector<8x256xf32>
    %8 = arith.truncf %7 : vector<8x256xf32> to vector<8x256xbf16>
    %c0_6 = arith.constant 0 : index
    %c0_7 = arith.constant 0 : index
    %9 = vector.load %arg4[%c0_6, %c0_7] : memref<256x128xbf16, #tpu.memory_space<vmem>>, vector<256x128xbf16>
    %cst_8 = arith.constant dense<0.000000e+00> : vector<8x128xf32>
    %10 = tpu.matmul %8, %9, %cst_8 {dimension_numbers = #tpu.dot_dimension_numbers<[1], [0], [0], [1], [0, 0, 1, 1], [], []>} : vector<8x256xbf16>, vector<256x128xbf16>, vector<8x128xf32> -> vector<8x128xf32>
    %c0_9 = arith.constant 0 : index
    %c0_10 = arith.constant 0 : index
    %11 = vector.load %arg5[%c0_9, %c0_10] : memref<1x128xf32, #tpu.memory_space<vmem>>, vector<1x128xf32>
    %12 = vector.broadcast %11 : vector<1x128xf32> to vector<8x128xf32>
    %13 = arith.addf %10, %12 : vector<8x128xf32>
    %c0_11 = arith.constant 0 : index
    %c0_12 = arith.constant 0 : index
    %14 = vector.load %arg6[%c0_11, %c0_12] : memref<8x128xf32, #tpu.memory_space<vmem>>, vector<8x128xf32>
    tpu.vector_store %arg6[%c0_11, %c0_12], %13 {strides = array<i32>} : memref<8x128xf32, #tpu.memory_space<vmem>>, vector<8x128xf32>,
    return
  }
  func.func @transform_0(%arg0: i32) -> (i32, i32) {
    %c0_i32 = arith.constant 0 : i32
    %c0_i32_0 = arith.constant 0 : i32
    return %arg0, %c0_i32 : i32, i32
  }
  func.func @transform_1(%arg0: i32) -> (i32, i32) {
    %c0_i32 = arith.constant 0 : i32
    %c0_i32_0 = arith.constant 0 : i32
    %c0_i32_1 = arith.constant 0 : i32
    return %c0_i32, %c0_i32_0 : i32, i32
  }
  func.func @transform_2(%arg0: i32) -> (i32, i32) {
    %c0_i32 = arith.constant 0 : i32
    %c0_i32_0 = arith.constant 0 : i32
    %c0_i32_1 = arith.constant 0 : i32
    return %c0_i32, %c0_i32_0 : i32, i32
  }
  func.func @transform_3(%arg0: i32) -> (i32, i32) {
    %c0_i32 = arith.constant 0 : i32
    %c0_i32_0 = arith.constant 0 : i32
    %c0_i32_1 = arith.constant 0 : i32
    return %c0_i32, %c0_i32_0 : i32, i32
  }
  func.func @transform_4(%arg0: i32) -> (i32, i32) {
    %c0_i32 = arith.constant 0 : i32
    %c0_i32_0 = arith.constant 0 : i32
    %c0_i32_1 = arith.constant 0 : i32
    return %c0_i32, %c0_i32_0 : i32, i32
  }
  func.func @transform_5(%arg0: i32) -> (i32, i32) {
    %c0_i32 = arith.constant 0 : i32
    %c0_i32_0 = arith.constant 0 : i32
    return %arg0, %c0_i32 : i32, i32
  }
}

</mosaic_0001>

<llo_original>
// kernel: cvae_generator_forward.1
$region0: #{cvae_generator_forward.1}
  #allocation0 [shape = 'u32[]', space=smem, size = 0x4, offset = 0x4, fixed_abs, tag = 'smem constant byte address 0x4 - core index']
  #allocation1 [shape = 'u32[144,128]{1,0:T(1,128)}', space=vmem, size = 0x12000, scoped, tag = 'internal scratch']
  %s0 = inlined_call_operand.vmem [shape: bf16[8,128], index: 0, kind: input, shape index: {}]
  %s1 = inlined_call_operand.vmem [shape: bf16[128,256], index: 1, kind: input, shape index: {}]
  %s2 = inlined_call_operand.vmem [shape: f32[1,256], index: 2, kind: input, shape index: {}]
  %s3 = inlined_call_operand.vmem [shape: bf16[256,128], index: 3, kind: input, shape index: {}]
  %s4 = inlined_call_operand.vmem [shape: f32[1,128], index: 4, kind: input, shape index: {}]
  %s5 = inlined_call_operand.hbm [shape: f32[8,128], index: 5, kind: output, shape index: {}]
  %s6 = sld [smem:[#allocation0]]
  $region30: #{cvae_generator_forward.1} parent=0
    _
  %s8 = ssub.s32 1, %s6
  %s9 = scalar_select 0, %s8, %s6
  $region1: #{cvae_generator_forward.1} parent=0
    #allocation2 [shape = 'u8[4096]{0}', space=vmem, size = 0x1000, scoped, tag = 'output window, operand 0, single buffered']
    #allocation3 [shape = 's32[1]{0}', space=sflag, size = 0x4, scoped, tag = 'scoped memory for cvae_generator_forward.1']
    %10 = vsyncpa [#allocation3], 0
    // Predicated region
    $region2: #{cvae_generator_forward.1} parent=1 // pred_check
      _
    $region3: #{cvae_generator_forward.1} parent=1 // pred_check_branch
      %12 = sbr.rel (0) target = $region5
    $region4: #{cvae_generator_forward.1} parent=1 // pred_region
      _
    $region5: #{cvae_generator_forward.1} parent=1 // pred_fallthru
      _
    // Predicated region
    $region6: #{cvae_generator_forward.1} parent=1 // pred_check
      _
    $region7: #{cvae_generator_forward.1} parent=1 // pred_check_branch
      %14 = sbr.rel (0) target = $region9
    $region8: #{cvae_generator_forward.1} parent=1 // pred_region
      _
    $region9: #{cvae_generator_forward.1} parent=1 // pred_fallthru
      _
    // Predicated region
    $region10: #{cvae_generator_forward.1} parent=1 // pred_check
      _
    $region11: #{cvae_generator_forward.1} parent=1 // pred_check_branch
      %16 = sbr.rel (0) target = $region13
    $region12: #{cvae_generator_forward.1} parent=1 // pred_region
      _
    $region13: #{cvae_generator_forward.1} parent=1 // pred_fallthru
      _
    // Predicated region
    $region14: #{cvae_generator_forward.1} parent=1 // pred_check
      _
    $region15: #{cvae_generator_forward.1} parent=1 // pred_check_branch
      %18 = sbr.rel (0) target = $region17
    $region16: #{cvae_generator_forward.1} parent=1 // pred_region
      _
    $region17: #{cvae_generator_forward.1} parent=1 // pred_fallthru
      _
    // Predicated region
    $region18: #{cvae_generator_forward.1} parent=1 // pred_check
      _
    $region19: #{cvae_generator_forward.1} parent=1 // pred_check_branch
      %20 = sbr.rel (0) target = $region21
    $region20: #{cvae_generator_forward.1} parent=1 // pred_region
      _
    $region21: #{cvae_generator_forward.1} parent=1 // pred_fallthru
      _
    %v22 = vld [vmem:[%s0] sm:$0xf]
    %v23 = vld [vmem:[%s1] sm:$0xff]
    %v24 = vld [vmem:[%s1 + $0x8] sm:$0xff]
    %v25 = vld [vmem:[%s1 + $0x10] sm:$0xff]
    %v26 = vld [vmem:[%s1 + $0x18] sm:$0xff]
    %v27 = vld [vmem:[%s1 + $0x20] sm:$0xff]
    %v28 = vld [vmem:[%s1 + $0x28] sm:$0xff]
    %v29 = vld [vmem:[%s1 + $0x30] sm:$0xff]
    %v30 = vld [vmem:[%s1 + $0x38] sm:$0xff]
    %v31 = vld [vmem:[%s1 + $0x40] sm:$0xff]
    %v32 = vld [vmem:[%s1 + $0x48] sm:$0xff]
    %v33 = vld [vmem:[%s1 + $0x50] sm:$0xff]
    %v34 = vld [vmem:[%s1 + $0x58] sm:$0xff]
    %v35 = vld [vmem:[%s1 + $0x60] sm:$0xff]
    %v36 = vld [vmem:[%s1 + $0x68] sm:$0xff]
    %v37 = vld [vmem:[%s1 + $0x70] sm:$0xff]
    %v38 = vld [vmem:[%s1 + $0x78] sm:$0xff]
    %v39 = vld [vmem:[%s2] sm:$0x3]
    %v41 = vlaneseq
    %v42 = vshrl.u32 %v41, 7
    %v43 = vsub.s32 0, %v42
    %v44 = vrot.slane %v39, %v43
    %v45 = vlaneseq
    %v46 = vshrl.u32 %v45, 7
    %v47 = vsub.s32 1, %v46
    %v48 = vrot.slane %v39, %v47
    %v67 = vunpack.c.l.b16 %v23
    %v68 = vunpack.c.h.b16 %v23
    %v69 = vunpack.c.l.b16 %v24
    %v70 = vunpack.c.h.b16 %v24
    %v71 = vunpack.c.l.b16 %v25
    %v72 = vunpack.c.h.b16 %v25
    %v73 = vunpack.c.l.b16 %v26
    %v74 = vunpack.c.h.b16 %v26
    %v75 = vunpack.c.l.b16 %v27
    %v76 = vunpack.c.h.b16 %v27
    %v77 = vunpack.c.l.b16 %v28
    %v78 = vunpack.c.h.b16 %v28
    %v79 = vunpack.c.l.b16 %v29
    %v80 = vunpack.c.h.b16 %v29
    %v81 = vunpack.c.l.b16 %v30
    %v82 = vunpack.c.h.b16 %v30
    %v83 = vunpack.c.l.b16 %v31
    %v84 = vunpack.c.h.b16 %v31
    %v85 = vunpack.c.l.b16 %v32
    %v86 = vunpack.c.h.b16 %v32
    %v87 = vunpack.c.l.b16 %v33
    %v88 = vunpack.c.h.b16 %v33
    %v89 = vunpack.c.l.b16 %v34
    %v90 = vunpack.c.h.b16 %v34
    %v91 = vunpack.c.l.b16 %v35
    %v92 = vunpack.c.h.b16 %v35
    %v93 = vunpack.c.l.b16 %v36
    %v94 = vunpack.c.h.b16 %v36
    %v95 = vunpack.c.l.b16 %v37
    %v96 = vunpack.c.h.b16 %v37
    %v97 = vunpack.c.l.b16 %v38
    %v98 = vunpack.c.h.b16 %v38
    %v99 = vpack.c.b16 %v69, %v67
    %v100 = vpack.c.b16 %v70, %v68
    %v101 = vpack.c.b16 %v73, %v71
    %v102 = vpack.c.b16 %v74, %v72
    %v103 = vpack.c.b16 %v77, %v75
    %v104 = vpack.c.b16 %v78, %v76
    %v105 = vpack.c.b16 %v81, %v79
    %v106 = vpack.c.b16 %v82, %v80
    %v107 = vpack.c.b16 %v85, %v83
    %v108 = vpack.c.b16 %v86, %v84
    %v109 = vpack.c.b16 %v89, %v87
    %v110 = vpack.c.b16 %v90, %v88
    %v111 = vpack.c.b16 %v93, %v91
    %v112 = vpack.c.b16 %v94, %v92
    %v113 = vpack.c.b16 %v97, %v95
    %v114 = vpack.c.b16 %v98, %v96
    %131 = vmatprep.subr.bf16.mxu0 %v100
    %132 = vmatpush1.bf16.msra.mxu0 %v99
    %133 = vmatprep.subr.bf16.mxu0 %v102
    %134 = vmatpush1.bf16.msra.mxu0 %v101
    %135 = vmatprep.subr.bf16.mxu0 %v104
    %136 = vmatpush1.bf16.msra.mxu0 %v103
    %137 = vmatprep.subr.bf16.mxu0 %v106
    %138 = vmatpush1.bf16.msra.mxu0 %v105
    %139 = vmatprep.subr.bf16.mxu0 %v108
    %140 = vmatpush1.bf16.msra.mxu0 %v107
    %141 = vmatprep.subr.bf16.mxu0 %v110
    %142 = vmatpush1.bf16.msra.mxu0 %v109
    %143 = vmatprep.subr.bf16.mxu0 %v112
    %144 = vmatpush1.bf16.msra.mxu0 %v111
    %145 = vmatprep.subr.bf16.mxu0 %v114
    %146 = vmatpush1.bf16.msra.mxu0 %v113
    %147 = vmatprep.subr.bf16.mxu0 0
    %148 = vmatpush1.bf16.msra.mxu0 0
    %149 = vmatprep.subr.bf16.mxu0 0
    %150 = vmatpush1.bf16.msra.mxu0 0
    %151 = vmatprep.subr.bf16.mxu0 0
    %152 = vmatpush1.bf16.msra.mxu0 0
    %153 = vmatprep.subr.bf16.mxu0 0
    %154 = vmatpush1.bf16.msra.mxu0 0
    %155 = vmatprep.subr.bf16.mxu0 0
    %156 = vmatpush1.bf16.msra.mxu0 0
    %157 = vmatprep.subr.bf16.mxu0 0
    %158 = vmatpush1.bf16.msra.mxu0 0
    %159 = vmatprep.subr.bf16.mxu0 0
    %160 = vmatpush1.bf16.msra.mxu0 0
    %161 = vmatprep.subr.bf16.mxu0 0
    %162 = vmatpush1.bf16.msra.mxu0 0
    %163 = vmatprep.mubr.bf16.mxu0 0
    %164 = vmatmul.mubr.bf16.gmra.mrb[0].mxu0 %v22
    %v165 = vpop.f32.mrb[0].mxu0
    %v166 = vadd.f32 %v44, %v165
    %v167 = vpop.f32.mrb[0].mxu0
    %v168 = vadd.f32 %v48, %v167
    %v169 = vpop.f32.mrb[0].mxu0
    %v170 = vpop.f32.mrb[0].mxu0
    %171 = vdwg.mxu0
    %v172 = vmax.f32 %v166, 0.0
    %v173 = vmax.f32 %v168, 0.0
    %v174 = vpack.c.bf16 %v172, %v172
    %v175 = vpack.c.bf16 %v173, %v173
    %v176 = vld [vmem:[%s3] sm:$0xf]
    %v177 = vld [vmem:[%s3 + $0x4] sm:$0xf]
    %v178 = vld [vmem:[%s3 + $0x8] sm:$0xf]
    %v179 = vld [vmem:[%s3 + $0xc] sm:$0xf]
    %v180 = vld [vmem:[%s3 + $0x10] sm:$0xf]
    %v181 = vld [vmem:[%s3 + $0x14] sm:$0xf]
    %v182 = vld [vmem:[%s3 + $0x18] sm:$0xf]
    %v183 = vld [vmem:[%s3 + $0x1c] sm:$0xf]
    %v184 = vld [vmem:[%s3 + $0x20] sm:$0xf]
    %v185 = vld [vmem:[%s3 + $0x24] sm:$0xf]
    %v186 = vld [vmem:[%s3 + $0x28] sm:$0xf]
    %v187 = vld [vmem:[%s3 + $0x2c] sm:$0xf]
    %v188 = vld [vmem:[%s3 + $0x30] sm:$0xf]
    %v189 = vld [vmem:[%s3 + $0x34] sm:$0xf]
    %v190 = vld [vmem:[%s3 + $0x38] sm:$0xf]
    %v191 = vld [vmem:[%s3 + $0x3c] sm:$0xf]
    %v192 = vld [vmem:[%s3 + $0x40] sm:$0xf]
    %v193 = vld [vmem:[%s3 + $0x44] sm:$0xf]
    %v194 = vld [vmem:[%s3 + $0x48] sm:$0xf]
    %v195 = vld [vmem:[%s3 + $0x4c] sm:$0xf]
    %v196 = vld [vmem:[%s3 + $0x50] sm:$0xf]
    %v197 = vld [vmem:[%s3 + $0x54] sm:$0xf]
    %v198 = vld [vmem:[%s3 + $0x58] sm:$0xf]
    %v199 = vld [vmem:[%s3 + $0x5c] sm:$0xf]
    %v200 = vld [vmem:[%s3 + $0x60] sm:$0xf]
    %v201 = vld [vmem:[%s3 + $0x64] sm:$0xf]
    %v202 = vld [vmem:[%s3 + $0x68] sm:$0xf]
    %v203 = vld [vmem:[%s3 + $0x6c] sm:$0xf]
    %v204 = vld [vmem:[%s3 + $0x70] sm:$0xf]
    %v205 = vld [vmem:[%s3 + $0x74] sm:$0xf]
    %v206 = vld [vmem:[%s3 + $0x78] sm:$0xf]
    %v207 = vld [vmem:[%s3 + $0x7c] sm:$0xf]
    %v208 = vld [vmem:[%s4] sm:$0x1]
    %v210 = vlaneseq
    %v211 = vshrl.u32 %v210, 7
    %v212 = vsub.s32 0, %v211
    %v213 = vrot.slane %v208, %v212
    %v247 = vunpack.c.l.b16 %v176
    %v248 = vunpack.c.l.b16 %v177
    %v249 = vunpack.c.l.b16 %v178
    %v250 = vunpack.c.l.b16 %v179
    %v251 = vunpack.c.l.b16 %v180
    %v252 = vunpack.c.l.b16 %v181
    %v253 = vunpack.c.l.b16 %v182
    %v254 = vunpack.c.l.b16 %v183
    %v255 = vunpack.c.l.b16 %v184
    %v256 = vunpack.c.l.b16 %v185
    %v257 = vunpack.c.l.b16 %v186
    %v258 = vunpack.c.l.b16 %v187
    %v259 = vunpack.c.l.b16 %v188
    %v260 = vunpack.c.l.b16 %v189
    %v261 = vunpack.c.l.b16 %v190
    %v262 = vunpack.c.l.b16 %v191
    %v263 = vunpack.c.l.b16 %v192
    %v264 = vunpack.c.l.b16 %v193
    %v265 = vunpack.c.l.b16 %v194
    %v266 = vunpack.c.l.b16 %v195
    %v267 = vunpack.c.l.b16 %v196
    %v268 = vunpack.c.l.b16 %v197
    %v269 = vunpack.c.l.b16 %v198
    %v270 = vunpack.c.l.b16 %v199
    %v271 = vunpack.c.l.b16 %v200
    %v272 = vunpack.c.l.b16 %v201
    %v273 = vunpack.c.l.b16 %v202
    %v274 = vunpack.c.l.b16 %v203
    %v275 = vunpack.c.l.b16 %v204
    %v276 = vunpack.c.l.b16 %v205
    %v277 = vunpack.c.l.b16 %v206
    %v278 = vunpack.c.l.b16 %v207
    %v279 = vpack.c.b16 %v248, %v247
    %v280 = vpack.c.b16 %v250, %v249
    %v281 = vpack.c.b16 %v252, %v251
    %v282 = vpack.c.b16 %v254, %v253
    %v283 = vpack.c.b16 %v256, %v255
    %v284 = vpack.c.b16 %v258, %v257
    %v285 = vpack.c.b16 %v260, %v259
    %v286 = vpack.c.b16 %v262, %v261
    %v287 = vpack.c.b16 %v264, %v263
    %v288 = vpack.c.b16 %v266, %v265
    %v289 = vpack.c.b16 %v268, %v267
    %v290 = vpack.c.b16 %v270, %v269
    %v291 = vpack.c.b16 %v272, %v271
    %v292 = vpack.c.b16 %v274, %v273
    %v293 = vpack.c.b16 %v276, %v275
    %v294 = vpack.c.b16 %v278, %v277
    %311 = vmatprep.subr.bf16.mxu0 0
    %312 = vmatpush1.bf16.msra.mxu0 %v279
    %313 = vmatprep.subr.bf16.mxu0 0
    %314 = vmatpush1.bf16.msra.mxu0 %v280
    %315 = vmatprep.subr.bf16.mxu0 0
    %316 = vmatpush1.bf16.msra.mxu0 %v281
    %317 = vmatprep.subr.bf16.mxu0 0
    %318 = vmatpush1.bf16.msra.mxu0 %v282
    %319 = vmatprep.subr.bf16.mxu0 0
    %320 = vmatpush1.bf16.msra.mxu0 %v283
    %321 = vmatprep.subr.bf16.mxu0 0
    %322 = vmatpush1.bf16.msra.mxu0 %v284
    %323 = vmatprep.subr.bf16.mxu0 0
    %324 = vmatpush1.bf16.msra.mxu0 %v285
    %325 = vmatprep.subr.bf16.mxu0 0
    %326 = vmatpush1.bf16.msra.mxu0 %v286
    %327 = vmatprep.subr.bf16.mxu0 0
    %328 = vmatpush1.bf16.msra.mxu0 %v287
    %329 = vmatprep.subr.bf16.mxu0 0
    %330 = vmatpush1.bf16.msra.mxu0 %v288
    %331 = vmatprep.subr.bf16.mxu0 0
    %332 = vmatpush1.bf16.msra.mxu0 %v289
    %333 = vmatprep.subr.bf16.mxu0 0
    %334 = vmatpush1.bf16.msra.mxu0 %v290
    %335 = vmatprep.subr.bf16.mxu0 0
    %336 = vmatpush1.bf16.msra.mxu0 %v291
    %337 = vmatprep.subr.bf16.mxu0 0
    %338 = vmatpush1.bf16.msra.mxu0 %v292
    %339 = vmatprep.subr.bf16.mxu0 0
    %340 = vmatpush1.bf16.msra.mxu0 %v293
    %341 = vmatprep.subr.bf16.mxu0 0
    %342 = vmatpush1.bf16.msra.mxu0 %v294
    %343 = vmatprep.mubr.bf16.mxu0 %v175
    %344 = vmatmul.mubr.bf16.gmra.mrb[0].mxu0 %v174
    %v345 = vpop.f32.mrb[0].mxu0
    %v346 = vadd.f32 %v213, %v345
    %v347 = vpop.f32.mrb[0].mxu0
    %v348 = vpop.f32.mrb[0].mxu0
    %v349 = vpop.f32.mrb[0].mxu0
    %350 = vdwg.mxu0
    %351 = vst [vmem:[#allocation2] sm:$0xff] %v346
    // Predicated region
    $region22: #{cvae_generator_forward.1} parent=1 // pred_check
      _
    $region23: #{cvae_generator_forward.1} parent=1 // pred_check_branch
      %353 = sbr.rel (0) target = $region25
    $region24: #{cvae_generator_forward.1} parent=1 // pred_region
      %s355 = ssub.s32 128, 128
      %356 = vsyncadd [#allocation3], %s355
      %s358 = sshll.u32 [#allocation2], 4
      %s359 = int_to_ptr.vmem [resolvable:$true] %s358
      %361 = dma.vmem_to_hbm [thread:$0]  %s359, 128, %s5, [#allocation3]
    $region25: #{cvae_generator_forward.1} parent=1 // pred_fallthru
      _
    // Predicated region
    $region26: #{cvae_generator_forward.1} parent=1 // pred_check
      _
    $region27: #{cvae_generator_forward.1} parent=1 // pred_check_branch
      %363 = sbr.rel (0) target = $region29
    $region28: #{cvae_generator_forward.1} parent=1 // pred_region
      %364 = dma.done [#allocation3], 128
    $region29: #{cvae_generator_forward.1} parent=1 // pred_fallthru
      _
    %365 = vsyncpa [#allocation3], 1

</llo_original>
